<compile_context>
chip_gen: v7x
topology: tpu7x:2x2x1
jax: 0.10.0
libtpu: 0.0.40
codegen_flags: <defaults>
</compile_context>

<pallas_src>
import math

import jax
import jax.numpy as jnp
from jax import lax
from jax.experimental import pallas as pl
from jax.experimental.pallas import tpu as pltpu


# ----------------------------------------------------------------------------
# Kernel
# ----------------------------------------------------------------------------
def _make_lorta_kernel(has_bias: bool, use_scratch: bool):
    """Build the kernel body for the given (bias present, scratch needed) case."""

    def kernel(x_ref, w_ref, *rest):
        # x_ref : (tm, tk)  activation tile (compute dtype)
        # w_ref : (tn, tk)  folded weight tile, (N, K) layout (NT contraction)
        # b_ref : (1,  tn)  bias tile (f32)            [only if has_bias]
        # o_ref : (tm, tn)  output tile (resident across the K axis)
        # acc   : (tm, tn)  f32 VMEM accumulator       [only if use_scratch]
        idx = 0
        if has_bias:
            b_ref = rest[idx]
            idx += 1
        o_ref = rest[idx]
        acc_ref = rest[idx + 1] if use_scratch else o_ref

        k = pl.program_id(2)

        @pl.when(k == 0)
        def _init():
            if has_bias:
                acc_ref[...] = jnp.broadcast_to(
                    b_ref[...].astype(acc_ref.dtype), acc_ref.shape)
            else:
                acc_ref[...] = jnp.zeros_like(acc_ref)

        acc_ref[...] += lax.dot_general(
            x_ref[...], w_ref[...],
            dimension_numbers=(((1,), (1,)), ((), ())),   # NT: contract K with K
            preferred_element_type=jnp.float32,
        ).astype(acc_ref.dtype)

        if use_scratch:
            @pl.when(k == pl.num_programs(2) - 1)
            def _finalize():
                o_ref[...] = acc_ref[...].astype(o_ref.dtype)

    return kernel


# ----------------------------------------------------------------------------
# Helpers
# ----------------------------------------------------------------------------
def _round_up(a, b):
    return -(-a // b) * b


def _pick_tile(padded_dim, max_tile, granule):
    """Largest multiple of `granule` <= max_tile that divides `padded_dim`."""
    t = max(granule, min(max_tile, padded_dim))
    t = (t // granule) * granule
    while padded_dim % t:
        t -= granule
    return t


def prepare_lorta_weights(w, bias, dw, scaling, *, compute_dtype=jnp.bfloat16):
    """Fold the adapter into the base weight once per adapter state.

    Returns (w_eff_padded (Np, Kp) in compute_dtype, bias_padded (1, Np) f32 or
    None).  Call once and reuse across forwards; this hoists the weight-sized
    fold / cast / pad HBM passes out of the per-call path.
    """
    N, K = w.shape
    Np = _round_up(N, 128)
    Kp = _round_up(K, 128)
    w_eff = w.astype(jnp.float32) + jnp.float32(scaling) * dw.astype(jnp.float32)
    w_eff = jnp.pad(w_eff.astype(compute_dtype), ((0, Np - N), (0, Kp - K)))
    if bias is None:
        b_pad = None
    else:
        b_pad = jnp.pad(bias.astype(jnp.float32).reshape(1, N),
                        ((0, 0), (0, Np - N)))
    return w_eff, b_pad


def lorta_linear_apply(x, w_eff_padded, bias_padded, out_features, *,
                       tm=512, tn=512, tk=512):
    """Run the fused LorTa Linear kernel on prepared (folded, padded) weights."""
    out_dtype = x.dtype
    compute_dtype = w_eff_padded.dtype
    *lead, K = x.shape
    Np, Kp = w_eff_padded.shape
    N = out_features
    assert K <= Kp and N <= Np

    M = math.prod(lead) if lead else 1
    x2 = x.reshape(M, K).astype(compute_dtype)

    # --- tile selection ------------------------------------------------------
    # N/K: pad only to the 128 lane boundary and pick tiles that divide the
    # padded dims (no dead MXU work / dead weight DMA).
    tn_ = _pick_tile(Np, tn, 128)
    tk_ = _pick_tile(Kp, tk, 128)
    # M: tile covers all of M when it fits (weight streamed from HBM once in
    # the weight-bandwidth-bound regime); otherwise pad M up to the tile.
    tm_ = min(tm, _round_up(M, 8))
    Mp = _round_up(M, tm_)

    x_p = jnp.pad(x2, ((0, Mp - M), (0, Kp - K)))

    has_bias = bias_padded is not None
    use_scratch = (jnp.dtype(out_dtype) != jnp.dtype(jnp.float32))

    grid = (Mp // tm_, Np // tn_, Kp // tk_)

    in_specs = [
        pl.BlockSpec((tm_, tk_), lambda i, j, k: (i, k)),   # x
        pl.BlockSpec((tn_, tk_), lambda i, j, k: (j, k)),   # w (N, K) layout
    ]
    operands = [x_p, w_eff_padded]
    if has_bias:
        in_specs.append(pl.BlockSpec((1, tn_), lambda i, j, k: (0, j)))
        operands.append(bias_padded)

    scratch_shapes = ([pltpu.VMEM((tm_, tn_), jnp.float32)]
                      if use_scratch else [])

    itemsize_c = jnp.dtype(compute_dtype).itemsize
    itemsize_o = jnp.dtype(out_dtype).itemsize
    cost = pl.CostEstimate(
        flops=2 * Mp * Np * Kp,
        transcendentals=0,
        bytes_accessed=(Mp * Kp * itemsize_c + Np * Kp * itemsize_c
                        + Mp * Np * itemsize_o
                        + (Np * 4 if has_bias else 0)),
    )

    out_p = pl.pallas_call(
        _make_lorta_kernel(has_bias, use_scratch),
        out_shape=jax.ShapeDtypeStruct((Mp, Np), out_dtype),
        grid_spec=pltpu.PrefetchScalarGridSpec(
            num_scalar_prefetch=0,
            grid=grid,
            in_specs=in_specs,
            out_specs=pl.BlockSpec((tm_, tn_), lambda i, j, k: (i, j)),
            scratch_shapes=scratch_shapes,
        ),
        compiler_params=pltpu.CompilerParams(
            dimension_semantics=("parallel", "parallel", "arbitrary"),
            # Above the 16/32 MiB scoped defaults (v5e / v6e-v7x), safely below
            # the 64 MiB physical per-core VMEM on v7x.
            vmem_limit_bytes=48 * 1024 * 1024,
        ),
        cost_estimate=cost,
    )(*operands)

    return out_p[:M, :N].reshape(*lead, N)


def lorta_linear_forward(x, w, bias, dw, scaling, *,
                         compute_dtype=jnp.bfloat16,
                         tm=512, tn=512, tk=512):
    """Convenience one-shot path: fold + apply.

    For repeated forwards with a fixed adapter state, call
    `prepare_lorta_weights` once and `lorta_linear_apply` per forward instead
    (removes the per-call weight-sized fold/cast/pad HBM passes).
    """
    N = w.shape[0]
    w_eff, b_pad = prepare_lorta_weights(w, bias, dw, scaling,
                                         compute_dtype=compute_dtype)
    return lorta_linear_apply(x, w_eff, b_pad, N, tm=tm, tn=tn, tk=tk)


# ----------------------------------------------------------------------------
# Self-test
# ----------------------------------------------------------------------------
if __name__ == "__main__":
    # Deterministic setup mirroring
    #   Linear(base_layer=nn.Linear(32, 32), adapter_name="default",
    #          r=4, lora_alpha=8, lora_dropout=0.0)
    # so scaling = lora_alpha / r = 2.0, and forward receives adapter_weight
    # dW with the same shape as the base weight (out_features, in_features).
    key = jax.random.PRNGKey(0)
    k_x, k_w, k_b, k_dw = jax.random.split(key, 4)

    batch, seq, in_features, out_features = 2, 8, 32, 32
    r, lora_alpha = 4, 8
    scaling = lora_alpha / r

    x = jax.random.normal(k_x, (batch, seq, in_features), dtype=jnp.float32)
    w_base = jax.random.normal(k_w, (out_features, in_features),
                               dtype=jnp.float32) * 0.1
    b_base = jax.random.normal(k_b, (out_features,), dtype=jnp.float32) * 0.1
    dw = jax.random.normal(k_dw, (out_features, in_features),
                           dtype=jnp.float32) * 0.05

    # Reference: exact unmerged semantics of Linear.forward
    #   result = base_layer(x) + dropout(x) @ dW.T * scaling
    ref = x @ w_base.T + b_base + (x @ dw.T) * scaling

    # 1) f32 compute path: exact semantics (fold is value-identical up to
    #    ulps); output f32 -> accumulates directly into the output block.
    out_f32 = jax.block_until_ready(
        lorta_linear_forward(x, w_base, b_base, dw, scaling,
                             compute_dtype=jnp.float32))
    assert out_f32.shape == ref.shape == (batch, seq, out_features)
    assert jnp.allclose(out_f32, ref, atol=1e-4, rtol=1e-4), (
        float(jnp.max(jnp.abs(out_f32 - ref))))

    # 2) bf16 MXU path (performance default), exercising the cached-weight
    #    prepare/apply split plus the no-bias kernel variant.
    w_eff_c, b_pad_c = prepare_lorta_weights(w_base, b_base, dw, scaling,
                                             compute_dtype=jnp.bfloat16)
    out_bf16 = jax.block_until_ready(
        lorta_linear_apply(x, w_eff_c, b_pad_c, out_features))
    assert out_bf16.shape == ref.shape
    assert jnp.allclose(out_bf16, ref, atol=5e-2, rtol=5e-2), (
        float(jnp.max(jnp.abs(out_bf16 - ref))))

    ref_nobias = ref - b_base
    w_eff_nb, b_none = prepare_lorta_weights(w_base, None, dw, scaling,
                                             compute_dtype=jnp.float32)
    out_nobias = jax.block_until_ready(
        lorta_linear_apply(x, w_eff_nb, b_none, out_features))
    assert jnp.allclose(out_nobias, ref_nobias, atol=1e-4, rtol=1e-4), (
        float(jnp.max(jnp.abs(out_nobias - ref_nobias))))

    # TODO(synk): merge/unmerge/DoRA/mixed `adapter_names` branches are not
    # implemented (they raise NotImplementedError in the reference module);
    # training-mode lora_dropout > 0 is also out of scope for this forward.
    print("KERNEL_OK")
</pallas_src>

<mosaic_0001>
module attributes {stable_mosaic.version = 11 : i64} {
  func.func @kernel(%arg0: i32, %arg1: i32, %arg2: i32, %arg3: memref<16x128xf32, #tpu.memory_space<vmem>>, %arg4: memref<128x128xf32, #tpu.memory_space<vmem>>, %arg5: memref<1x128xf32, #tpu.memory_space<vmem>>, %arg6: memref<16x128xf32, #tpu.memory_space<vmem>>) attributes {dimension_semantics = [#tpu.dimension_semantics<parallel>, #tpu.dimension_semantics<parallel>, #tpu.dimension_semantics<arbitrary>], iteration_bounds = array<i64: 1, 1, 1>, scalar_prefetch = 0 : i64, scratch_operands = 0 : i64, tpu.core_type = #tpu.core_type<tc>, window_params = [{transform_indices = @transform_0, window_bounds = array<i64: 16, 128>}, {transform_indices = @transform_1, window_bounds = array<i64: 128, 128>}, {transform_indices = @transform_2, window_bounds = array<i64: 1, 128>}, {transform_indices = @transform_3, window_bounds = array<i64: 16, 128>}]} {
    %c0_i32 = arith.constant 0 : i32
    %0 = arith.cmpi eq, %arg2, %c0_i32 : i32
    %1 = arith.extui %0 : i1 to i32
    %c0_i32_0 = arith.constant 0 : i32
    %2 = arith.cmpi ne, %1, %c0_i32_0 : i32
    scf.if %2 {
      %c0_8 = arith.constant 0 : index
      %c0_9 = arith.constant 0 : index
      %9 = vector.load %arg5[%c0_8, %c0_9] : memref<1x128xf32, #tpu.memory_space<vmem>>, vector<1x128xf32>
      %10 = vector.shape_cast %9 : vector<1x128xf32> to vector<1x128xf32>
      %11 = vector.broadcast %10 : vector<1x128xf32> to vector<16x128xf32>
      %c0_10 = arith.constant 0 : index
      %c0_11 = arith.constant 0 : index
      %12 = vector.load %arg6[%c0_10, %c0_11] : memref<16x128xf32, #tpu.memory_space<vmem>>, vector<16x128xf32>
      tpu.vector_store %arg6[%c0_10, %c0_11], %11 {strides = array<i32>} : memref<16x128xf32, #tpu.memory_space<vmem>>, vector<16x128xf32>,
    } else {
    }
    %c0 = arith.constant 0 : index
    %c0_1 = arith.constant 0 : index
    %3 = vector.load %arg6[%c0, %c0_1] : memref<16x128xf32, #tpu.memory_space<vmem>>, vector<16x128xf32>
    %c0_2 = arith.constant 0 : index
    %c0_3 = arith.constant 0 : index
    %4 = vector.load %arg3[%c0_2, %c0_3] : memref<16x128xf32, #tpu.memory_space<vmem>>, vector<16x128xf32>
    %c0_4 = arith.constant 0 : index
    %c0_5 = arith.constant 0 : index
    %5 = vector.load %arg4[%c0_4, %c0_5] : memref<128x128xf32, #tpu.memory_space<vmem>>, vector<128x128xf32>
    %cst = arith.constant dense<0.000000e+00> : vector<16x128xf32>
    %6 = tpu.matmul %4, %5, %cst {dimension_numbers = #tpu.dot_dimension_numbers<[1], [1], [0], [0], [0, 0, 1, 0], [], []>} : vector<16x128xf32>, vector<128x128xf32>, vector<16x128xf32> -> vector<16x128xf32>
    %7 = arith.addf %3, %6 : vector<16x128xf32>
    %c0_6 = arith.constant 0 : index
    %c0_7 = arith.constant 0 : index
    %8 = vector.load %arg6[%c0_6, %c0_7] : memref<16x128xf32, #tpu.memory_space<vmem>>, vector<16x128xf32>
    tpu.vector_store %arg6[%c0_6, %c0_7], %7 {strides = array<i32>} : memref<16x128xf32, #tpu.memory_space<vmem>>, vector<16x128xf32>,
    return
  }
  func.func @transform_0(%arg0: i32, %arg1: i32, %arg2: i32) -> (i32, i32) {
    %c0_i32 = arith.constant 0 : i32
    return %arg0, %arg2 : i32, i32
  }
  func.func @transform_1(%arg0: i32, %arg1: i32, %arg2: i32) -> (i32, i32) {
    %c0_i32 = arith.constant 0 : i32
    return %arg1, %arg2 : i32, i32
  }
  func.func @transform_2(%arg0: i32, %arg1: i32, %arg2: i32) -> (i32, i32) {
    %c0_i32 = arith.constant 0 : i32
    %c0_i32_0 = arith.constant 0 : i32
    return %c0_i32, %arg1 : i32, i32
  }
  func.func @transform_3(%arg0: i32, %arg1: i32, %arg2: i32) -> (i32, i32) {
    %c0_i32 = arith.constant 0 : i32
    return %arg0, %arg1 : i32, i32
  }
}

</mosaic_0001>

<llo_original>
// kernel: tpu_custom_call.1
$region0: #{tpu_custom_call.1}
  #allocation0 [shape = 'u32[]', space=smem, size = 0x4, offset = 0x4, fixed_abs, tag = 'smem constant byte address 0x4 - core index']
  #allocation1 [shape = 'u32[144,128]{1,0:T(1,128)}', space=vmem, size = 0x12000, scoped, tag = 'internal scratch']
  %s0 = inlined_call_operand.hbm [shape: f32[16,128], index: 0, kind: input, shape index: {}]
  %s1 = inlined_call_operand.hbm [shape: f32[128,128], index: 1, kind: input, shape index: {}]
  %s2 = inlined_call_operand.vmem [shape: f32[1,128], index: 2, kind: input, shape index: {}]
  %s3 = inlined_call_operand.hbm [shape: f32[16,128], index: 3, kind: output, shape index: {}]
  %s4 = sld [smem:[#allocation0]]
  $region34: #{tpu_custom_call.1} parent=0
    _
  %s6 = ssub.s32 1, %s4
  %s7 = scalar_select 0, %s6, %s4
  $region1: #{tpu_custom_call.1} parent=0
    #allocation2 [shape = 'u8[8192]{0}', space=vmem, size = 0x2000, scoped, tag = 'input window, operand 0, single buffered']
    #allocation3 [shape = 's32[1]{0}', space=sflag, size = 0x4, scoped, tag = 'scoped memory for tpu_custom_call.1']
    #allocation4 [shape = 's32[1]{0}', space=sflag, size = 0x4, scoped, tag = 'scoped memory for tpu_custom_call.1']
    #allocation5 [shape = 'u8[65536]{0}', space=vmem, size = 0x10000, scoped, tag = 'input window, operand 1, single buffered']
    #allocation6 [shape = 's32[1]{0}', space=sflag, size = 0x4, scoped, tag = 'scoped memory for tpu_custom_call.1']
    #allocation7 [shape = 'u8[8192]{0}', space=vmem, size = 0x2000, scoped, tag = 'output window, operand 0, single buffered']
    %8 = vsyncpa [#allocation3], 0
    %9 = vsyncpa [#allocation6], 0
    %10 = vsyncpa [#allocation4], 0
    // Predicated region
    $region2: #{tpu_custom_call.1} parent=1 // pred_check
      _
    $region3: #{tpu_custom_call.1} parent=1 // pred_check_branch
      %12 = sbr.rel (0) target = $region5
    $region4: #{tpu_custom_call.1} parent=1 // pred_region
      %s14 = ssub.s32 256, 256
      %15 = vsyncadd [#allocation3], %s14
      %s16 = sshll.u32 [#allocation2], 4
      %s17 = int_to_ptr.vmem [resolvable:$true] %s16
      %22 = dma.hbm_to_vmem [thread:$0]  %s0, 256, %s17, [#allocation3], 128, 128, 8
    $region5: #{tpu_custom_call.1} parent=1 // pred_fallthru
      _
    // Predicated region
    $region6: #{tpu_custom_call.1} parent=1 // pred_check
      _
    $region7: #{tpu_custom_call.1} parent=1 // pred_check_branch
      %24 = sbr.rel (0) target = $region9
    $region8: #{tpu_custom_call.1} parent=1 // pred_region
      %s26 = ssub.s32 2048, 2048
      %27 = vsyncadd [#allocation6], %s26
      %s28 = sshll.u32 [#allocation5], 4
      %s29 = int_to_ptr.vmem [resolvable:$true] %s28
      %34 = dma.hbm_to_vmem [thread:$0]  %s1, 2048, %s29, [#allocation6], 128, 128, 8
    $region9: #{tpu_custom_call.1} parent=1 // pred_fallthru
      _
    // Predicated region
    $region10: #{tpu_custom_call.1} parent=1 // pred_check
      _
    $region11: #{tpu_custom_call.1} parent=1 // pred_check_branch
      %36 = sbr.rel (0) target = $region13
    $region12: #{tpu_custom_call.1} parent=1 // pred_region
      _
    $region13: #{tpu_custom_call.1} parent=1 // pred_fallthru
      _
    // Predicated region
    $region14: #{tpu_custom_call.1} parent=1 // pred_check
      _
    $region15: #{tpu_custom_call.1} parent=1 // pred_check_branch
      %38 = sbr.rel (0) target = $region17
    $region16: #{tpu_custom_call.1} parent=1 // pred_region
      %39 = dma.done [#allocation3], 256
    $region17: #{tpu_custom_call.1} parent=1 // pred_fallthru
      _
    // Predicated region
    $region18: #{tpu_custom_call.1} parent=1 // pred_check
      _
    $region19: #{tpu_custom_call.1} parent=1 // pred_check_branch
      %41 = sbr.rel (0) target = $region21
    $region20: #{tpu_custom_call.1} parent=1 // pred_region
      %42 = dma.done [#allocation6], 2048
    $region21: #{tpu_custom_call.1} parent=1 // pred_fallthru
      _
    %p43 = scmp.eq.s32.totalorder 0, 0
    // Predicated region
    $region22: #{tpu_custom_call.1} parent=1 // pred_check
      %p44 = pneg %p43
    $region23: #{tpu_custom_call.1} parent=1 // pred_check_branch
      %46 = sbr.rel (%p44) target = $region25
    $region24: #{tpu_custom_call.1} parent=1 // pred_region
      %v47 = vld [vmem:[%s2] sm:$0x1]
      %v49 = vlaneseq
      %v50 = vshrl.u32 %v49, 7
      %v51 = vsub.s32 0, %v50
      %v52 = vrot.slane %v47, %v51
      %54 = vst [vmem:[#allocation7] sm:$0xff] %v52
      %55 = vst [vmem:[#allocation7 + $0x8] sm:$0xff] %v52
    $region25: #{tpu_custom_call.1} parent=1 // pred_fallthru
      _
    %v56 = vld [vmem:[#allocation7] sm:$0xff]
    %v57 = vld [vmem:[#allocation7 + $0x8] sm:$0xff]
    %v58 = vld [vmem:[#allocation2] sm:$0xff]
    %v59 = vld [vmem:[#allocation2 + $0x8] sm:$0xff]
    %v60 = vld [vmem:[#allocation5] sm:$0xff]
    %v61 = vld [vmem:[#allocation5 + $0x8] sm:$0xff]
    %v62 = vld [vmem:[#allocation5 + $0x10] sm:$0xff]
    %v63 = vld [vmem:[#allocation5 + $0x18] sm:$0xff]
    %v64 = vld [vmem:[#allocation5 + $0x20] sm:$0xff]
    %v65 = vld [vmem:[#allocation5 + $0x28] sm:$0xff]
    %v66 = vld [vmem:[#allocation5 + $0x30] sm:$0xff]
    %v67 = vld [vmem:[#allocation5 + $0x38] sm:$0xff]
    %v68 = vld [vmem:[#allocation5 + $0x40] sm:$0xff]
    %v69 = vld [vmem:[#allocation5 + $0x48] sm:$0xff]
    %v70 = vld [vmem:[#allocation5 + $0x50] sm:$0xff]
    %v71 = vld [vmem:[#allocation5 + $0x58] sm:$0xff]
    %v72 = vld [vmem:[#allocation5 + $0x60] sm:$0xff]
    %v73 = vld [vmem:[#allocation5 + $0x68] sm:$0xff]
    %v74 = vld [vmem:[#allocation5 + $0x70] sm:$0xff]
    %v75 = vld [vmem:[#allocation5 + $0x78] sm:$0xff]
    %76 = vmatprep.subr.mxu0 0.0
    %77 = vmatpush1.xpose.msra.mxu0 %v60
    %78 = vmatprep.subr.mxu0 0.0
    %79 = vmatpush1.xpose.msra.mxu0 %v61
    %80 = vmatprep.subr.mxu0 0.0
    %81 = vmatpush1.xpose.msra.mxu0 %v62
    %82 = vmatprep.subr.mxu0 0.0
    %83 = vmatpush1.xpose.msra.mxu0 %v63
    %84 = vmatprep.subr.mxu0 0.0
    %85 = vmatpush1.xpose.msra.mxu0 %v64
    %86 = vmatprep.subr.mxu0 0.0
    %87 = vmatpush1.xpose.msra.mxu0 %v65
    %88 = vmatprep.subr.mxu0 0.0
    %89 = vmatpush1.xpose.msra.mxu0 %v66
    %90 = vmatprep.subr.mxu0 0.0
    %91 = vmatpush1.xpose.msra.mxu0 %v67
    %92 = vmatprep.subr.mxu0 0.0
    %93 = vmatpush1.xpose.msra.mxu0 %v68
    %94 = vmatprep.subr.mxu0 0.0
    %95 = vmatpush1.xpose.msra.mxu0 %v69
    %96 = vmatprep.subr.mxu0 0.0
    %97 = vmatpush1.xpose.msra.mxu0 %v70
    %98 = vmatprep.subr.mxu0 0.0
    %99 = vmatpush1.xpose.msra.mxu0 %v71
    %100 = vmatprep.subr.mxu0 0.0
    %101 = vmatpush1.xpose.msra.mxu0 %v72
    %102 = vmatprep.subr.mxu0 0.0
    %103 = vmatpush1.xpose.msra.mxu0 %v73
    %104 = vmatprep.subr.mxu0 0.0
    %105 = vmatpush1.xpose.msra.mxu0 %v74
    %106 = vmatprep.subr.mxu0 0.0
    %107 = vmatpush1.xpose.msra.mxu0 %v75
    %108 = vmatprep.subr.mxu0 0.0
    %109 = vmatpush1.xpose.msra.mxu0 0.0
    %110 = vmatprep.subr.mxu0 0.0
    %111 = vmatpush1.xpose.msra.mxu0 0.0
    %112 = vmatprep.subr.mxu0 0.0
    %113 = vmatpush1.xpose.msra.mxu0 0.0
    %114 = vmatprep.subr.mxu0 0.0
    %115 = vmatpush1.xpose.msra.mxu0 0.0
    %116 = vmatprep.subr.mxu0 0.0
    %117 = vmatpush1.xpose.msra.mxu0 0.0
    %118 = vmatprep.subr.mxu0 0.0
    %119 = vmatpush1.xpose.msra.mxu0 0.0
    %120 = vmatprep.subr.mxu0 0.0
    %121 = vmatpush1.xpose.msra.mxu0 0.0
    %122 = vmatprep.subr.mxu0 0.0
    %123 = vmatpush1.xpose.msra.mxu0 0.0
    %124 = vmatprep.subr.mxu0 0.0
    %125 = vmatpush1.xpose.msra.mxu0 0.0
    %126 = vmatprep.subr.mxu0 0.0
    %127 = vmatpush1.xpose.msra.mxu0 0.0
    %128 = vmatprep.subr.mxu0 0.0
    %129 = vmatpush1.xpose.msra.mxu0 0.0
    %130 = vmatprep.subr.mxu0 0.0
    %131 = vmatpush1.xpose.msra.mxu0 0.0
    %132 = vmatprep.subr.mxu0 0.0
    %133 = vmatpush1.xpose.msra.mxu0 0.0
    %134 = vmatprep.subr.mxu0 0.0
    %135 = vmatpush1.xpose.msra.mxu0 0.0
    %136 = vmatprep.subr.mxu0 0.0
    %137 = vmatpush1.xpose.msra.mxu0 0.0
    %138 = vmatprep.subr.mxu0 0.0
    %139 = vmatpush1.xpose.msra.mxu0 0.0
    %140 = vmatprep.mubr.f32.mxu0 0.0
    %141 = vmatmul.mubr.f32.gmra.mrb[0].mxu0 %v58
    %v142 = vpop.f32.mrb[0].mxu0
    %v143 = vadd.f32 0.0, %v142
    %v144 = vpop.f32.mrb[0].mxu0
    %145 = vmatprep.mubr.f32.mxu0 0.0
    %146 = vmatmul.mubr.f32.gmra.mrb[0].mxu0 %v59
    %v147 = vpop.f32.mrb[0].mxu0
    %v148 = vadd.f32 0.0, %v147
    %v149 = vpop.f32.mrb[0].mxu0
    %150 = vdwg.mxu0
    %v151 = vadd.f32 %v56, %v143
    %v152 = vadd.f32 %v57, %v148
    %153 = vst [vmem:[#allocation7] sm:$0xff] %v151
    %154 = vst [vmem:[#allocation7 + $0x8] sm:$0xff] %v152
    // Predicated region
    $region26: #{tpu_custom_call.1} parent=1 // pred_check
      _
    $region27: #{tpu_custom_call.1} parent=1 // pred_check_branch
      %156 = sbr.rel (0) target = $region29
    $region28: #{tpu_custom_call.1} parent=1 // pred_region
      %s158 = ssub.s32 256, 256
      %159 = vsyncadd [#allocation4], %s158
      %s160 = sshll.u32 [#allocation7], 4
      %s161 = int_to_ptr.vmem [resolvable:$true] %s160
      %166 = dma.vmem_to_hbm [thread:$0]  %s161, 256, %s3, [#allocation4], 128, 128, 8
    $region29: #{tpu_custom_call.1} parent=1 // pred_fallthru
      _
    // Predicated region
    $region30: #{tpu_custom_call.1} parent=1 // pred_check
      _
    $region31: #{tpu_custom_call.1} parent=1 // pred_check_branch
      %168 = sbr.rel (0) target = $region33
    $region32: #{tpu_custom_call.1} parent=1 // pred_region
      %169 = dma.done [#allocation4], 256
    $region33: #{tpu_custom_call.1} parent=1 // pred_fallthru
      _
    %170 = vsyncpa [#allocation3], 1
    %171 = vsyncpa [#allocation6], 1
    %172 = vsyncpa [#allocation4], 1

</llo_original>
